<compile_context>
chip_gen: v5e
topology: v5e:2x2
jax: 0.10.0
libtpu: 0.0.40
codegen_flags: <defaults>
</compile_context>

<pallas_src>
import jax
import jax.numpy as jnp
from jax.experimental import pallas as pl
from jax.experimental.pallas import tpu as pltpu


# ---------------------------------------------------------------------------
# Kernel body: one batch element per grid step.
# ---------------------------------------------------------------------------
def _rel_tagger_kernel(enc_ref, hw_ref, hb_ref, tw_ref, tb_ref, fld_ref,
                       w0_ref, w1_ref, out_ref):
    f32 = jnp.float32

    def nt(a, b):
        # a:(m,k) . b:(n,k) contracted on k  ==  a @ b.T, with the transpose
        # absorbed into the MXU dimension_numbers (no data movement at all).
        return jax.lax.dot_general(
            a, b, dimension_numbers=(((1,), (1,)), ((), ())),
            preferred_element_type=f32)

    enc = enc_ref[...]                                    # (S, H)
    head = nt(enc, hw_ref[...]) + hb_ref[...]             # (S, H) f32
    tail = nt(enc, tw_ref[...]) + tb_ref[...]             # (S, H) f32
    t0 = nt(tail, w0_ref[...].astype(f32))                # (S, H) f32
    t1 = nt(tail, w1_ref[...].astype(f32))                # (S, H) f32

    head_cat = jnp.concatenate(
        [fld_ref[...].astype(f32), head], axis=0)         # (NF + S, H) f32

    # score_k = head_cat @ t_k^T  -- the model's transpose(1, 2), fused.
    out_ref[0] = nt(head_cat, t0).astype(out_ref.dtype)   # (NF + S, S)
    out_ref[1] = nt(head_cat, t1).astype(out_ref.dtype)   # (NF + S, S)


# ---------------------------------------------------------------------------
# Wrapper: RelationTagger.forward(enc) -> (B, 2, n_fields + S, S)
# ---------------------------------------------------------------------------
def relation_tagger_scores(enc, head_w, head_b, tail_w, tail_b,
                           field_embeddings, w_label_0, w_label_1):
    """Pallas equivalent of RelationTagger.forward(enc) (inference path).

    enc:               (B, S, H)
    head_w/tail_w:     (H, H)   nn.Linear weight (out, in) layout
    head_b/tail_b:     (H,)
    field_embeddings:  (1, NF, H) or (NF, H)
    w_label_0/1:       (H, H)   bias-free nn.Linear weight
    returns:           (B, 2, NF + S, S)
    """
    B, S, H = enc.shape
    NF = field_embeddings.shape[-2]
    M = NF + S

    fld = field_embeddings.reshape(NF, H).astype(enc.dtype)
    hb = head_b.reshape(1, H)
    tb = tail_b.reshape(1, H)

    out_shape = jax.ShapeDtypeStruct((B, 2, M, S), enc.dtype)

    itm = jnp.dtype(enc.dtype).itemsize
    flops = int(B * (8 * S * H * H + 4 * M * S * H))
    bytes_accessed = int(itm * (B * S * H              # enc read
                                + 4 * H * H + 2 * H + NF * H   # weights read
                                + B * 2 * M * S))      # scores written

    # Per-step VMEM: double-buffered enc/out blocks, resident weights (still
    # allocated double-buffered), plus f32 intermediates.  Cap at v7x's 64 MiB
    # physical so the limit is legal on every generation.
    est = (2 * itm * (S * H + 2 * M * S)
           + 2 * itm * (4 * H * H + 2 * H + NF * H)
           + 4 * (5 * S * H + M * H + 2 * M * S))
    vmem_limit = int(min(max(2 * est, 32 * 1024 * 1024), 64 * 1024 * 1024))

    enc_spec = pl.BlockSpec((pl.Squeezed(), S, H), lambda b: (b, 0, 0))
    mat_spec = pl.BlockSpec((H, H), lambda b: (0, 0))
    bias_spec = pl.BlockSpec((1, H), lambda b: (0, 0))
    fld_spec = pl.BlockSpec((NF, H), lambda b: (0, 0))
    out_spec = pl.BlockSpec((pl.Squeezed(), 2, M, S), lambda b: (b, 0, 0, 0))

    return pl.pallas_call(
        _rel_tagger_kernel,
        out_shape=out_shape,
        grid_spec=pltpu.PrefetchScalarGridSpec(
            num_scalar_prefetch=0,
            grid=(B,),
            in_specs=[enc_spec, mat_spec, bias_spec, mat_spec, bias_spec,
                      fld_spec, mat_spec, mat_spec],
            out_specs=out_spec,
        ),
        compiler_params=pltpu.CompilerParams(
            dimension_semantics=("parallel",),
            vmem_limit_bytes=vmem_limit,
        ),
        cost_estimate=pl.CostEstimate(
            flops=flops, transcendentals=0, bytes_accessed=bytes_accessed),
    )(enc, head_w, hb, tail_w, tb, fld, w_label_0, w_label_1)


# ---------------------------------------------------------------------------
# Self-test
# ---------------------------------------------------------------------------
if __name__ == "__main__":
    B, S, H, NF = 2, 16, 32, 4

    key = jax.random.PRNGKey(0)
    k_enc, k_s, k_g = jax.random.split(key, 3)
    enc = jax.random.normal(k_enc, (B, S, H), dtype=jnp.float32)

    def make_params(k):
        ks = jax.random.split(k, 7)
        return dict(
            head_w=0.1 * jax.random.normal(ks[0], (H, H), jnp.float32),
            head_b=0.1 * jax.random.normal(ks[1], (H,), jnp.float32),
            tail_w=0.1 * jax.random.normal(ks[2], (H, H), jnp.float32),
            tail_b=0.1 * jax.random.normal(ks[3], (H,), jnp.float32),
            field_embeddings=jax.random.uniform(ks[4], (1, NF, H), jnp.float32),
            w_label_0=0.1 * jax.random.normal(ks[5], (H, H), jnp.float32),
            w_label_1=0.1 * jax.random.normal(ks[6], (H, H), jnp.float32),
        )

    params_s = make_params(k_s)   # rel_s tagger
    params_g = make_params(k_g)   # rel_g tagger

    rel_s = jax.block_until_ready(relation_tagger_scores(enc, **params_s))
    rel_g = jax.block_until_ready(relation_tagger_scores(enc, **params_g))

    # Pure-JAX reference that mirrors the PyTorch module literally, including
    # the explicit transpose(1, 2) that the kernel fuses away.
    def reference(enc, p):
        eh = enc @ p["head_w"].T + p["head_b"]
        et = enc @ p["tail_w"].T + p["tail_b"]
        fe = jnp.broadcast_to(p["field_embeddings"], (enc.shape[0], NF, H))
        ehc = jnp.concatenate([fe, eh], axis=1)
        t0 = et @ p["w_label_0"].T
        t1 = et @ p["w_label_1"].T
        s0 = ehc @ jnp.swapaxes(t0, 1, 2)
        s1 = ehc @ jnp.swapaxes(t1, 1, 2)
        return jnp.concatenate([s0[:, None], s1[:, None]], axis=1)

    for out, p, name in ((rel_s, params_s, "rel_s"), (rel_g, params_g, "rel_g")):
        ref = reference(enc, p)
        assert out.shape == ref.shape == (B, 2, NF + S, S), name
        assert out.dtype == ref.dtype, name
        assert bool(jnp.allclose(out, ref, rtol=1e-5, atol=1e-5)), \
            f"mismatch ({name})"

    print("KERNEL_OK")
</pallas_src>

<mosaic_0001>
module attributes {stable_mosaic.version = 11 : i64} {
  func.func @_rel_tagger_kernel(%arg0: i32, %arg1: memref<1x16x32xf32, #tpu.memory_space<vmem>>, %arg2: memref<32x32xf32, #tpu.memory_space<vmem>>, %arg3: memref<1x32xf32, #tpu.memory_space<vmem>>, %arg4: memref<32x32xf32, #tpu.memory_space<vmem>>, %arg5: memref<1x32xf32, #tpu.memory_space<vmem>>, %arg6: memref<4x32xf32, #tpu.memory_space<vmem>>, %arg7: memref<32x32xf32, #tpu.memory_space<vmem>>, %arg8: memref<32x32xf32, #tpu.memory_space<vmem>>, %arg9: memref<1x2x20x16xf32, #tpu.memory_space<vmem>>) attributes {dimension_semantics = [#tpu.dimension_semantics<parallel>], iteration_bounds = array<i64: 2>, scalar_prefetch = 0 : i64, scratch_operands = 0 : i64, tpu.core_type = #tpu.core_type<tc>, window_params = [{transform_indices = @transform_0, window_bounds = array<i64: 1, 16, 32>}, {pipeline_mode = #tpu.pipeline_mode<synchronous>, transform_indices = @transform_1, window_bounds = array<i64: 32, 32>}, {pipeline_mode = #tpu.pipeline_mode<synchronous>, transform_indices = @transform_2, window_bounds = array<i64: 1, 32>}, {pipeline_mode = #tpu.pipeline_mode<synchronous>, transform_indices = @transform_3, window_bounds = array<i64: 32, 32>}, {pipeline_mode = #tpu.pipeline_mode<synchronous>, transform_indices = @transform_4, window_bounds = array<i64: 1, 32>}, {pipeline_mode = #tpu.pipeline_mode<synchronous>, transform_indices = @transform_5, window_bounds = array<i64: 4, 32>}, {pipeline_mode = #tpu.pipeline_mode<synchronous>, transform_indices = @transform_6, window_bounds = array<i64: 32, 32>}, {pipeline_mode = #tpu.pipeline_mode<synchronous>, transform_indices = @transform_7, window_bounds = array<i64: 32, 32>}, {transform_indices = @transform_8, window_bounds = array<i64: 1, 2, 20, 16>}]} {
    %c0 = arith.constant 0 : index
    %c0_0 = arith.constant 0 : index
    %c0_1 = arith.constant 0 : index
    %0 = vector.load %arg1[%c0, %c0_0, %c0_1] : memref<1x16x32xf32, #tpu.memory_space<vmem>>, vector<1x16x32xf32>
    %1 = vector.shape_cast %0 : vector<1x16x32xf32> to vector<16x32xf32>
    %c0_2 = arith.constant 0 : index
    %c0_3 = arith.constant 0 : index
    %2 = vector.load %arg2[%c0_2, %c0_3] : memref<32x32xf32, #tpu.memory_space<vmem>>, vector<32x32xf32>
    %cst = arith.constant dense<0.000000e+00> : vector<16x32xf32>
    %3 = tpu.matmul %1, %2, %cst {dimension_numbers = #tpu.dot_dimension_numbers<[1], [1], [0], [0], [0, 0, 1, 0], [], []>} : vector<16x32xf32>, vector<32x32xf32>, vector<16x32xf32> -> vector<16x32xf32>
    %c0_4 = arith.constant 0 : index
    %c0_5 = arith.constant 0 : index
    %4 = vector.load %arg3[%c0_4, %c0_5] : memref<1x32xf32, #tpu.memory_space<vmem>>, vector<1x32xf32>
    %5 = vector.broadcast %4 : vector<1x32xf32> to vector<16x32xf32>
    %6 = arith.addf %3, %5 : vector<16x32xf32>
    %c0_6 = arith.constant 0 : index
    %c0_7 = arith.constant 0 : index
    %7 = vector.load %arg4[%c0_6, %c0_7] : memref<32x32xf32, #tpu.memory_space<vmem>>, vector<32x32xf32>
    %cst_8 = arith.constant dense<0.000000e+00> : vector<16x32xf32>
    %8 = tpu.matmul %1, %7, %cst_8 {dimension_numbers = #tpu.dot_dimension_numbers<[1], [1], [0], [0], [0, 0, 1, 0], [], []>} : vector<16x32xf32>, vector<32x32xf32>, vector<16x32xf32> -> vector<16x32xf32>
    %c0_9 = arith.constant 0 : index
    %c0_10 = arith.constant 0 : index
    %9 = vector.load %arg5[%c0_9, %c0_10] : memref<1x32xf32, #tpu.memory_space<vmem>>, vector<1x32xf32>
    %10 = vector.broadcast %9 : vector<1x32xf32> to vector<16x32xf32>
    %11 = arith.addf %8, %10 : vector<16x32xf32>
    %c0_11 = arith.constant 0 : index
    %c0_12 = arith.constant 0 : index
    %12 = vector.load %arg7[%c0_11, %c0_12] : memref<32x32xf32, #tpu.memory_space<vmem>>, vector<32x32xf32>
    %cst_13 = arith.constant dense<0.000000e+00> : vector<16x32xf32>
    %13 = tpu.matmul %11, %12, %cst_13 {dimension_numbers = #tpu.dot_dimension_numbers<[1], [1], [0], [0], [0, 0, 1, 0], [], []>} : vector<16x32xf32>, vector<32x32xf32>, vector<16x32xf32> -> vector<16x32xf32>
    %c0_14 = arith.constant 0 : index
    %c0_15 = arith.constant 0 : index
    %14 = vector.load %arg8[%c0_14, %c0_15] : memref<32x32xf32, #tpu.memory_space<vmem>>, vector<32x32xf32>
    %cst_16 = arith.constant dense<0.000000e+00> : vector<16x32xf32>
    %15 = tpu.matmul %11, %14, %cst_16 {dimension_numbers = #tpu.dot_dimension_numbers<[1], [1], [0], [0], [0, 0, 1, 0], [], []>} : vector<16x32xf32>, vector<32x32xf32>, vector<16x32xf32> -> vector<16x32xf32>
    %c0_17 = arith.constant 0 : index
    %c0_18 = arith.constant 0 : index
    %16 = vector.load %arg6[%c0_17, %c0_18] : memref<4x32xf32, #tpu.memory_space<vmem>>, vector<4x32xf32>
    %17 = tpu.concatenate %16, %6 in 0 : vector<4x32xf32>, vector<16x32xf32> -> vector<20x32xf32>
    %cst_19 = arith.constant dense<0.000000e+00> : vector<20x16xf32>
    %18 = tpu.matmul %17, %13, %cst_19 {dimension_numbers = #tpu.dot_dimension_numbers<[1], [1], [0], [0], [0, 0, 1, 0], [], []>} : vector<20x32xf32>, vector<16x32xf32>, vector<20x16xf32> -> vector<20x16xf32>
    %c0_20 = arith.constant 0 : index
    %c0_21 = arith.constant 0 : index
    %c0_22 = arith.constant 0 : index
    %c0_23 = arith.constant 0 : index
    %19 = vector.load %arg9[%c0_20, %c0_21, %c0_22, %c0_23] : memref<1x2x20x16xf32, #tpu.memory_space<vmem>>, vector<1x1x20x16xf32>
    %20 = vector.shape_cast %19 : vector<1x1x20x16xf32> to vector<20x16xf32>
    %21 = vector.shape_cast %18 : vector<20x16xf32> to vector<1x1x20x16xf32>
    tpu.vector_store %arg9[%c0_20, %c0_21, %c0_22, %c0_23], %21 {strides = array<i32>} : memref<1x2x20x16xf32, #tpu.memory_space<vmem>>, vector<1x1x20x16xf32>,
    %cst_24 = arith.constant dense<0.000000e+00> : vector<20x16xf32>
    %22 = tpu.matmul %17, %15, %cst_24 {dimension_numbers = #tpu.dot_dimension_numbers<[1], [1], [0], [0], [0, 0, 1, 0], [], []>} : vector<20x32xf32>, vector<16x32xf32>, vector<20x16xf32> -> vector<20x16xf32>
    %c0_25 = arith.constant 0 : index
    %c1 = arith.constant 1 : index
    %c0_26 = arith.constant 0 : index
    %c0_27 = arith.constant 0 : index
    %23 = vector.load %arg9[%c0_25, %c1, %c0_26, %c0_27] : memref<1x2x20x16xf32, #tpu.memory_space<vmem>>, vector<1x1x20x16xf32>
    %24 = vector.shape_cast %23 : vector<1x1x20x16xf32> to vector<20x16xf32>
    %25 = vector.shape_cast %22 : vector<20x16xf32> to vector<1x1x20x16xf32>
    tpu.vector_store %arg9[%c0_25, %c1, %c0_26, %c0_27], %25 {strides = array<i32>} : memref<1x2x20x16xf32, #tpu.memory_space<vmem>>, vector<1x1x20x16xf32>,
    return
  }
  func.func @transform_0(%arg0: i32) -> (i32, i32, i32) {
    %c0_i32 = arith.constant 0 : i32
    %c0_i32_0 = arith.constant 0 : i32
    %c0_i32_1 = arith.constant 0 : i32
    return %arg0, %c0_i32, %c0_i32_0 : i32, i32, i32
  }
  func.func @transform_1(%arg0: i32) -> (i32, i32) {
    %c0_i32 = arith.constant 0 : i32
    %c0_i32_0 = arith.constant 0 : i32
    %c0_i32_1 = arith.constant 0 : i32
    return %c0_i32, %c0_i32_0 : i32, i32
  }
  func.func @transform_2(%arg0: i32) -> (i32, i32) {
    %c0_i32 = arith.constant 0 : i32
    %c0_i32_0 = arith.constant 0 : i32
    %c0_i32_1 = arith.constant 0 : i32
    return %c0_i32, %c0_i32_0 : i32, i32
  }
  func.func @transform_3(%arg0: i32) -> (i32, i32) {
    %c0_i32 = arith.constant 0 : i32
    %c0_i32_0 = arith.constant 0 : i32
    %c0_i32_1 = arith.constant 0 : i32
    return %c0_i32, %c0_i32_0 : i32, i32
  }
  func.func @transform_4(%arg0: i32) -> (i32, i32) {
    %c0_i32 = arith.constant 0 : i32
    %c0_i32_0 = arith.constant 0 : i32
    %c0_i32_1 = arith.constant 0 : i32
    return %c0_i32, %c0_i32_0 : i32, i32
  }
  func.func @transform_5(%arg0: i32) -> (i32, i32) {
    %c0_i32 = arith.constant 0 : i32
    %c0_i32_0 = arith.constant 0 : i32
    %c0_i32_1 = arith.constant 0 : i32
    return %c0_i32, %c0_i32_0 : i32, i32
  }
  func.func @transform_6(%arg0: i32) -> (i32, i32) {
    %c0_i32 = arith.constant 0 : i32
    %c0_i32_0 = arith.constant 0 : i32
    %c0_i32_1 = arith.constant 0 : i32
    return %c0_i32, %c0_i32_0 : i32, i32
  }
  func.func @transform_7(%arg0: i32) -> (i32, i32) {
    %c0_i32 = arith.constant 0 : i32
    %c0_i32_0 = arith.constant 0 : i32
    %c0_i32_1 = arith.constant 0 : i32
    return %c0_i32, %c0_i32_0 : i32, i32
  }
  func.func @transform_8(%arg0: i32) -> (i32, i32, i32, i32) {
    %c0_i32 = arith.constant 0 : i32
    %c0_i32_0 = arith.constant 0 : i32
    %c0_i32_1 = arith.constant 0 : i32
    %c0_i32_2 = arith.constant 0 : i32
    return %arg0, %c0_i32, %c0_i32_0, %c0_i32_1 : i32, i32, i32, i32
  }
}

</mosaic_0001>

<llo_original>
// kernel: tpu_custom_call.1
$region0: #{tpu_custom_call.1}
  #allocation0 [shape = 'u32[]', space=smem, size = 0x4, offset = 0x4, fixed_abs, tag = 'smem constant byte address 0x4 - core index']
  #allocation1 [shape = 'u32[72,128]{1,0:T(1,128)}', space=vmem, size = 0x9000, scoped, tag = 'internal scratch']
  %s0 = inlined_call_operand.hbm [shape: f32[2,16,32], index: 0, kind: input, shape index: {}]
  %s1 = inlined_call_operand.hbm [shape: f32[32,32], index: 1, kind: input, shape index: {}]
  %s2 = inlined_call_operand.hbm [shape: f32[1,32], index: 2, kind: input, shape index: {}]
  %s3 = inlined_call_operand.hbm [shape: f32[32,32], index: 3, kind: input, shape index: {}]
  %s4 = inlined_call_operand.hbm [shape: f32[1,32], index: 4, kind: input, shape index: {}]
  %s5 = inlined_call_operand.vmem [shape: f32[4,32], index: 5, kind: input, shape index: {}]
  %s6 = inlined_call_operand.hbm [shape: f32[32,32], index: 6, kind: input, shape index: {}]
  %s7 = inlined_call_operand.hbm [shape: f32[32,32], index: 7, kind: input, shape index: {}]
  %s8 = inlined_call_operand.vmem [shape: f32[2,2,20,16], index: 8, kind: output, shape index: {}]
  %s9 = sld [smem:[#allocation0]]
  $region93: #{tpu_custom_call.1} parent=0
    _
  %s11 = ssub.s32 1, %s9
  %s12 = scalar_select 0, %s11, %s9
  $region1: #{tpu_custom_call.1} parent=0
    #allocation2 [shape = 'u8[16384]{0}', space=vmem, size = 0x4000, scoped, tag = 'input window, operand 0']
    #allocation3 [shape = 's32[2]{0}', space=sflag, size = 0x8, scoped, tag = 'scoped memory for tpu_custom_call.1']
    #allocation4 [shape = 'u8[16384]{0}', space=vmem, size = 0x4000, scoped, tag = 'input window, operand 1, single buffered']
    #allocation5 [shape = 's32[1]{0}', space=sflag, size = 0x4, scoped, tag = 'scoped memory for tpu_custom_call.1']
    #allocation6 [shape = 'u8[512]{0}', space=vmem, size = 0x400, scoped, tag = 'input window, operand 2, single buffered']
    #allocation7 [shape = 'u8[16384]{0}', space=vmem, size = 0x4000, scoped, tag = 'input window, operand 3, single buffered']
    #allocation8 [shape = 's32[1]{0}', space=sflag, size = 0x4, scoped, tag = 'scoped memory for tpu_custom_call.1']
    #allocation9 [shape = 'u8[512]{0}', space=vmem, size = 0x400, scoped, tag = 'input window, operand 4, single buffered']
    #allocation10 [shape = 'u8[16384]{0}', space=vmem, size = 0x4000, scoped, tag = 'input window, operand 6, single buffered']
    #allocation11 [shape = 's32[1]{0}', space=sflag, size = 0x4, scoped, tag = 'scoped memory for tpu_custom_call.1']
    #allocation12 [shape = 'u8[16384]{0}', space=vmem, size = 0x4000, scoped, tag = 'input window, operand 7, single buffered']
    %13 = vsyncpa [#allocation3], 0
    %s14 = scalar_lea.sflag [#allocation3], 1
    %15 = vsyncpa %s14, 0
    %16 = vsyncpa [#allocation5], 0
    %17 = vsyncpa [#allocation8], 0
    %18 = vsyncpa [#allocation11], 0
    loop: start=0, step=1, limit=4
    $region2: #{tpu_custom_call.1} parent=1 // loop_pre_header
      _
    $region3: #{tpu_custom_call.1} parent=1 // loop_header
      %s20 = sphi 0, %s24
      %p21 = scmp.ge.s32.totalorder %s20, 4
      %s30 = sphi 0, %s32
      %s33 = sphi 0, %s30
      %s34 = sphi 0, %s33
      %s50 = sphi 0, %s34
      %s54 = sphi 0, %s54
      %s56 = sphi 0, %s54
      %s57 = sphi 0, %s56
      %s71 = sphi 0, %s57
      %s75 = sphi 0, %s75
      %s77 = sphi 0, %s75
      %s78 = sphi 0, %s77
      %s92 = sphi 0, %s78
      %s96 = sphi 0, %s96
      %s98 = sphi 0, %s96
      %s99 = sphi 0, %s98
      %s113 = sphi 0, %s99
      %s117 = sphi 0, %s117
      %s119 = sphi 0, %s117
      %s120 = sphi 0, %s119
      %s134 = sphi 0, %s120
      %s138 = sphi 0, %s138
      %s140 = sphi 0, %s138
      %s141 = sphi 0, %s140
      %s155 = sphi 0, %s141
      %s159 = sphi 0, %s159
      %s161 = sphi 0, %s159
      %s162 = sphi 0, %s161
      %s176 = sphi 0, %s162
      %s180 = sphi 0, %s180
      %s182 = sphi 0, %s180
      %s183 = sphi 0, %s182
      %s197 = sphi 0, %s183
      %s203 = sphi 0, %s205
      %s206 = sphi 0, %s203
      %s207 = sphi 0, %s206
      %s223 = sphi 0, %s207
    $region4: #{tpu_custom_call.1} parent=1 // loop_header_branch
      %23 = sbr.rel (%p21) target = $region8
    $region5: #{tpu_custom_call.1} parent=1 // loop_body
      %s25 = ssub.s32 %s20, 1
      %s26 = ssub.s32 %s20, 2
      %s27 = sadd.s32 %s20, 1
      %s28 = ssub.s32 %s20, %s27
      %p29 = scmp.eq.s32.totalorder %s28, 0
      %s31 = sadd.s32 %s30, 1
      %s32 = scalar_select %p29, %s30, %s31
      %p35 = pneg %p29
      %p36 = scmp.eq.s32.totalorder %s20, 1
      %p37 = por %p35, %p36
      %p38 = scmp.ne.s32.totalorder %s30, %s33
      %p39 = scmp.eq.s32.totalorder %s20, 0
      %p40 = por %p38, %p39
      %p41 = scmp.ne.s32.totalorder %s30, %s33
      %p42 = scmp.eq.s32.totalorder %s25, 1
      %p43 = por %p41, %p42
      %p44 = scmp.ne.s32.totalorder %s33, %s34
      %p45 = scmp.eq.s32.totalorder %s25, 0
      %p46 = por %p44, %p45
      %p47 = scmp.ne.s32.totalorder %s33, %s34
      %p48 = scmp.eq.s32.totalorder %s26, 1
      %p49 = por %p47, %p48
      %p51 = scmp.ne.s32.totalorder %s34, %s50
      %p52 = scmp.eq.s32.totalorder %s26, 0
      %p53 = por %p51, %p52
      %s55 = sadd.s32 %s54, 1
      %p58 = scmp.eq.s32.totalorder %s20, 1
      %p59 = scmp.ne.s32.totalorder %s54, %s56
      %p60 = scmp.eq.s32.totalorder %s20, 0
      %p61 = por %p59, %p60
      %p62 = scmp.ne.s32.totalorder %s54, %s56
      %p63 = scmp.eq.s32.totalorder %s25, 1
      %p64 = por %p62, %p63
      %p65 = scmp.ne.s32.totalorder %s56, %s57
      %p66 = scmp.eq.s32.totalorder %s25, 0
      %p67 = por %p65, %p66
      %p68 = scmp.ne.s32.totalorder %s56, %s57
      %p69 = scmp.eq.s32.totalorder %s26, 1
      %p70 = por %p68, %p69
      %p72 = scmp.ne.s32.totalorder %s57, %s71
      %p73 = scmp.eq.s32.totalorder %s26, 0
      %p74 = por %p72, %p73
      %s76 = sadd.s32 %s75, 1
      %p79 = scmp.eq.s32.totalorder %s20, 1
      %p80 = scmp.ne.s32.totalorder %s75, %s77
      %p81 = scmp.eq.s32.totalorder %s20, 0
      %p82 = por %p80, %p81
      %p83 = scmp.ne.s32.totalorder %s75, %s77
      %p84 = scmp.eq.s32.totalorder %s25, 1
      %p85 = por %p83, %p84
      %p86 = scmp.ne.s32.totalorder %s77, %s78
      %p87 = scmp.eq.s32.totalorder %s25, 0
      %p88 = por %p86, %p87
      %p89 = scmp.ne.s32.totalorder %s77, %s78
      %p90 = scmp.eq.s32.totalorder %s26, 1
      %p91 = por %p89, %p90
      %p93 = scmp.ne.s32.totalorder %s78, %s92
      %p94 = scmp.eq.s32.totalorder %s26, 0
      %p95 = por %p93, %p94
      %s97 = sadd.s32 %s96, 1
      %p100 = scmp.eq.s32.totalorder %s20, 1
      %p101 = scmp.ne.s32.totalorder %s96, %s98
      %p102 = scmp.eq.s32.totalorder %s20, 0
      %p103 = por %p101, %p102
      %p104 = scmp.ne.s32.totalorder %s96, %s98
      %p105 = scmp.eq.s32.totalorder %s25, 1
      %p106 = por %p104, %p105
      %p107 = scmp.ne.s32.totalorder %s98, %s99
      %p108 = scmp.eq.s32.totalorder %s25, 0
      %p109 = por %p107, %p108
      %p110 = scmp.ne.s32.totalorder %s98, %s99
      %p111 = scmp.eq.s32.totalorder %s26, 1
      %p112 = por %p110, %p111
      %p114 = scmp.ne.s32.totalorder %s99, %s113
      %p115 = scmp.eq.s32.totalorder %s26, 0
      %p116 = por %p114, %p115
      %s118 = sadd.s32 %s117, 1
      %p121 = scmp.eq.s32.totalorder %s20, 1
      %p122 = scmp.ne.s32.totalorder %s117, %s119
      %p123 = scmp.eq.s32.totalorder %s20, 0
      %p124 = por %p122, %p123
      %p125 = scmp.ne.s32.totalorder %s117, %s119
      %p126 = scmp.eq.s32.totalorder %s25, 1
      %p127 = por %p125, %p126
      %p128 = scmp.ne.s32.totalorder %s119, %s120
      %p129 = scmp.eq.s32.totalorder %s25, 0
      %p130 = por %p128, %p129
      %p131 = scmp.ne.s32.totalorder %s119, %s120
      %p132 = scmp.eq.s32.totalorder %s26, 1
      %p133 = por %p131, %p132
      %p135 = scmp.ne.s32.totalorder %s120, %s134
      %p136 = scmp.eq.s32.totalorder %s26, 0
      %p137 = por %p135, %p136
      %s139 = sadd.s32 %s138, 1
      %p142 = scmp.eq.s32.totalorder %s20, 1
      %p143 = scmp.ne.s32.totalorder %s138, %s140
      %p144 = scmp.eq.s32.totalorder %s20, 0
      %p145 = por %p143, %p144
      %p146 = scmp.ne.s32.totalorder %s138, %s140
      %p147 = scmp.eq.s32.totalorder %s25, 1
      %p148 = por %p146, %p147
      %p149 = scmp.ne.s32.totalorder %s140, %s141
      %p150 = scmp.eq.s32.totalorder %s25, 0
      %p151 = por %p149, %p150
      %p152 = scmp.ne.s32.totalorder %s140, %s141
      %p153 = scmp.eq.s32.totalorder %s26, 1
      %p154 = por %p152, %p153
      %p156 = scmp.ne.s32.totalorder %s141, %s155
      %p157 = scmp.eq.s32.totalorder %s26, 0
      %p158 = por %p156, %p157
      %s160 = sadd.s32 %s159, 1
      %p163 = scmp.eq.s32.totalorder %s20, 1
      %p164 = scmp.ne.s32.totalorder %s159, %s161
      %p165 = scmp.eq.s32.totalorder %s20, 0
      %p166 = por %p164, %p165
      %p167 = scmp.ne.s32.totalorder %s159, %s161
      %p168 = scmp.eq.s32.totalorder %s25, 1
      %p169 = por %p167, %p168
      %p170 = scmp.ne.s32.totalorder %s161, %s162
      %p171 = scmp.eq.s32.totalorder %s25, 0
      %p172 = por %p170, %p171
      %p173 = scmp.ne.s32.totalorder %s161, %s162
      %p174 = scmp.eq.s32.totalorder %s26, 1
      %p175 = por %p173, %p174
      %p177 = scmp.ne.s32.totalorder %s162, %s176
      %p178 = scmp.eq.s32.totalorder %s26, 0
      %p179 = por %p177, %p178
      %s181 = sadd.s32 %s180, 1
      %p184 = scmp.eq.s32.totalorder %s20, 1
      %p185 = scmp.ne.s32.totalorder %s180, %s182
      %p186 = scmp.eq.s32.totalorder %s20, 0
      %p187 = por %p185, %p186
      %p188 = scmp.ne.s32.totalorder %s180, %s182
      %p189 = scmp.eq.s32.totalorder %s25, 1
      %p190 = por %p188, %p189
      %p191 = scmp.ne.s32.totalorder %s182, %s183
      %p192 = scmp.eq.s32.totalorder %s25, 0
      %p193 = por %p191, %p192
      %p194 = scmp.ne.s32.totalorder %s182, %s183
      %p195 = scmp.eq.s32.totalorder %s26, 1
      %p196 = por %p194, %p195
      %p198 = scmp.ne.s32.totalorder %s183, %s197
      %p199 = scmp.eq.s32.totalorder %s26, 0
      %p200 = por %p198, %p199
      %s201 = ssub.s32 %s20, %s27
      %p202 = scmp.eq.s32.totalorder %s201, 0
      %s204 = sadd.s32 %s203, 1
      %s205 = scalar_select %p202, %s203, %s204
      %p208 = pneg %p202
      %p209 = scmp.eq.s32.totalorder %s20, 1
      %p210 = por %p208, %p209
      %p211 = scmp.ne.s32.totalorder %s203, %s206
      %p212 = scmp.eq.s32.totalorder %s20, 0
      %p213 = por %p211, %p212
      %p214 = scmp.ne.s32.totalorder %s203, %s206
      %p215 = scmp.eq.s32.totalorder %s25, 1
      %p216 = por %p214, %p215
      %p217 = scmp.ne.s32.totalorder %s206, %s207
      %p218 = scmp.eq.s32.totalorder %s25, 0
      %p219 = por %p217, %p218
      %p220 = scmp.ne.s32.totalorder %s206, %s207
      %p221 = scmp.eq.s32.totalorder %s26, 1
      %p222 = por %p220, %p221
      %p224 = scmp.ne.s32.totalorder %s207, %s223
      %p225 = scmp.eq.s32.totalorder %s26, 0
      %p226 = por %p224, %p225
      %p227 = scmp.le.s32.totalorder 1, %s20
      %p228 = scmp.lt.s32.totalorder %s20, 3
      %p229 = pnand %p227, %p228
      %p230 = pneg %p229
      // Predicated region
      $region9: #{tpu_custom_call.1} parent=5 // pred_check
        _
      $region10: #{tpu_custom_call.1} parent=5 // pred_check_branch
        %232 = sbr.rel (%p229) target = $region12
      $region11: #{tpu_custom_call.1} parent=5 // pred_region
        %s233 = ssub.s32 %s20, 1
        // Predicated region
        $region13: #{tpu_custom_call.1} parent=11 // pred_check
          %p234 = pneg %p67
        $region14: #{tpu_custom_call.1} parent=11 // pred_check_branch
          %236 = sbr.rel (%p234) target = $region16
        $region15: #{tpu_custom_call.1} parent=11 // pred_region
          %238 = vsyncadd [#allocation5], 0
          %s239 = sshll.u32 %s1, 4
          %s240 = int_to_ptr.hbm [resolvable:$true] %s239
          %s241 = sshll.u32 [#allocation4], 4
          %s242 = int_to_ptr.vmem [resolvable:$true] %s241
          %247 = dma.hbm_to_vmem [thread:$0]  %s240, 512, %s242, [#allocation5], 128, 128, 8
        $region16: #{tpu_custom_call.1} parent=11 // pred_fallthru
          _
        // Predicated region
        $region17: #{tpu_custom_call.1} parent=11 // pred_check
          %p248 = pneg %p88
        $region18: #{tpu_custom_call.1} parent=11 // pred_check_branch
          %250 = sbr.rel (%p248) target = $region20
        $region19: #{tpu_custom_call.1} parent=11 // pred_region
          %252 = vsyncadd [#allocation5], 0
          %s254 = sshll.u32 %s2, 4
          %s255 = int_to_ptr.hbm [resolvable:$true] %s254
          %s256 = sshll.u32 [#allocation6], 4
          %s257 = int_to_ptr.vmem [resolvable:$true] %s256
          %259 = dma.hbm_to_vmem [thread:$0]  %s255, 16, %s257, [#allocation5]
        $region20: #{tpu_custom_call.1} parent=11 // pred_fallthru
          _
        // Predicated region
        $region21: #{tpu_custom_call.1} parent=11 // pred_check
          %p260 = pneg %p109
        $region22: #{tpu_custom_call.1} parent=11 // pred_check_branch
          %262 = sbr.rel (%p260) target = $region24
        $region23: #{tpu_custom_call.1} parent=11 // pred_region
          %264 = vsyncadd [#allocation8], 0
          %s265 = sshll.u32 %s3, 4
          %s266 = int_to_ptr.hbm [resolvable:$true] %s265
          %s267 = sshll.u32 [#allocation7], 4
          %s268 = int_to_ptr.vmem [resolvable:$true] %s267
          %273 = dma.hbm_to_vmem [thread:$0]  %s266, 512, %s268, [#allocation8], 128, 128, 8
        $region24: #{tpu_custom_call.1} parent=11 // pred_fallthru
          _
        // Predicated region
        $region25: #{tpu_custom_call.1} parent=11 // pred_check
          %p274 = pneg %p130
        $region26: #{tpu_custom_call.1} parent=11 // pred_check_branch
          %276 = sbr.rel (%p274) target = $region28
        $region27: #{tpu_custom_call.1} parent=11 // pred_region
          %278 = vsyncadd [#allocation8], 0
          %s280 = sshll.u32 %s4, 4
          %s281 = int_to_ptr.hbm [resolvable:$true] %s280
          %s282 = sshll.u32 [#allocation9], 4
          %s283 = int_to_ptr.vmem [resolvable:$true] %s282
          %285 = dma.hbm_to_vmem [thread:$0]  %s281, 16, %s283, [#allocation8]
        $region28: #{tpu_custom_call.1} parent=11 // pred_fallthru
          _
        // Predicated region
        $region29: #{tpu_custom_call.1} parent=11 // pred_check
          %p286 = pneg %p151
        $region30: #{tpu_custom_call.1} parent=11 // pred_check_branch
          %288 = sbr.rel (%p286) target = $region32
        $region31: #{tpu_custom_call.1} parent=11 // pred_region
          _
        $region32: #{tpu_custom_call.1} parent=11 // pred_fallthru
          _
        // Predicated region
        $region33: #{tpu_custom_call.1} parent=11 // pred_check
          %p289 = pneg %p172
        $region34: #{tpu_custom_call.1} parent=11 // pred_check_branch
          %291 = sbr.rel (%p289) target = $region36
        $region35: #{tpu_custom_call.1} parent=11 // pred_region
          %293 = vsyncadd [#allocation11], 0
          %s294 = sshll.u32 %s6, 4
          %s295 = int_to_ptr.hbm [resolvable:$true] %s294
          %s296 = sshll.u32 [#allocation10], 4
          %s297 = int_to_ptr.vmem [resolvable:$true] %s296
          %302 = dma.hbm_to_vmem [thread:$0]  %s295, 512, %s297, [#allocation11], 128, 128, 8
        $region36: #{tpu_custom_call.1} parent=11 // pred_fallthru
          _
        // Predicated region
        $region37: #{tpu_custom_call.1} parent=11 // pred_check
          %p303 = pneg %p193
        $region38: #{tpu_custom_call.1} parent=11 // pred_check_branch
          %305 = sbr.rel (%p303) target = $region40
        $region39: #{tpu_custom_call.1} parent=11 // pred_region
          %307 = vsyncadd [#allocation11], 0
          %s308 = sshll.u32 %s7, 4
          %s309 = int_to_ptr.hbm [resolvable:$true] %s308
          %s310 = sshll.u32 [#allocation12], 4
          %s311 = int_to_ptr.vmem [resolvable:$true] %s310
          %316 = dma.hbm_to_vmem [thread:$0]  %s309, 512, %s311, [#allocation11], 128, 128, 8
        $region40: #{tpu_custom_call.1} parent=11 // pred_fallthru
          _
      $region12: #{tpu_custom_call.1} parent=5 // pred_fallthru
        _
      %p317 = scmp.lt.s32.totalorder %s20, 2
      // Predicated region
      $region41: #{tpu_custom_call.1} parent=5 // pred_check
        %p318 = pneg %p317
      $region42: #{tpu_custom_call.1} parent=5 // pred_check_branch
        %320 = sbr.rel (%p318) target = $region44
      $region43: #{tpu_custom_call.1} parent=5 // pred_region
        // Predicated region
        $region45: #{tpu_custom_call.1} parent=43 // pred_check
          %p321 = pneg %p40
        $region46: #{tpu_custom_call.1} parent=43 // pred_check_branch
          %323 = sbr.rel (%p321) target = $region48
        $region47: #{tpu_custom_call.1} parent=43 // pred_region
          %s324 = sand.u32 %s30, 1
          %s325 = scalar_lea.sflag [#allocation3], %s324
          %s326 = sand.u32 %s30, 1
          %s327 = smul.addr %s326, 16
          %s328 = scalar_lea.vmem [#allocation2], %s327
          %330 = vsyncadd %s325, 0
          %s331 = smul.addr %s20, 2
          %s332 = smul.addr %s331, 8
          %s333 = scalar_lea.hbm %s0, %s332
          %s334 = sshll.u32 %s333, 4
          %s335 = int_to_ptr.hbm [resolvable:$true] %s334
          %s336 = sshll.u32 %s328, 4
          %s337 = int_to_ptr.vmem [resolvable:$true] %s336
          %342 = dma.hbm_to_vmem [thread:$0]  %s335, 256, %s337, %s325, 128, 128, 8
        $region48: #{tpu_custom_call.1} parent=43 // pred_fallthru
          _
      $region44: #{tpu_custom_call.1} parent=5 // pred_fallthru
        _
      %p343 = scmp.le.s32.totalorder 1, %s20
      %p344 = scmp.lt.s32.totalorder %s20, 3
      %p345 = pnand %p343, %p344
      %p346 = pneg %p345
      // Predicated region
      $region49: #{tpu_custom_call.1} parent=5 // pred_check
        _
      $region50: #{tpu_custom_call.1} parent=5 // pred_check_branch
        %348 = sbr.rel (%p345) target = $region52
      $region51: #{tpu_custom_call.1} parent=5 // pred_region
        %s349 = ssub.s32 %s20, 1
        %s350 = sand.u32 %s33, 1
        %s351 = scalar_lea.sflag [#allocation3], %s350
        %s352 = sand.u32 %s33, 1
        %s353 = smul.addr %s352, 16
        %s354 = scalar_lea.vmem [#allocation2], %s353
        // Predicated region
        $region53: #{tpu_custom_call.1} parent=51 // pred_check
          %p355 = pneg %p46
        $region54: #{tpu_custom_call.1} parent=51 // pred_check_branch
          %357 = sbr.rel (%p355) target = $region56
        $region55: #{tpu_custom_call.1} parent=51 // pred_region
          %359 = dma.done %s351, 256
        $region56: #{tpu_custom_call.1} parent=51 // pred_fallthru
          _
        // Predicated region
        $region57: #{tpu_custom_call.1} parent=51 // pred_check
          %p360 = pneg %p67
        $region58: #{tpu_custom_call.1} parent=51 // pred_check_branch
          %362 = sbr.rel (%p360) target = $region60
        $region59: #{tpu_custom_call.1} parent=51 // pred_region
          %364 = dma.done [#allocation5], 512
        $region60: #{tpu_custom_call.1} parent=51 // pred_fallthru
          _
        // Predicated region
        $region61: #{tpu_custom_call.1} parent=51 // pred_check
          %p365 = pneg %p88
        $region62: #{tpu_custom_call.1} parent=51 // pred_check_branch
          %367 = sbr.rel (%p365) target = $region64
        $region63: #{tpu_custom_call.1} parent=51 // pred_region
          %369 = dma.done [#allocation5], 16
        $region64: #{tpu_custom_call.1} parent=51 // pred_fallthru
          _
        // Predicated region
        $region65: #{tpu_custom_call.1} parent=51 // pred_check
          %p370 = pneg %p109
        $region66: #{tpu_custom_call.1} parent=51 // pred_check_branch
          %372 = sbr.rel (%p370) target = $region68
        $region67: #{tpu_custom_call.1} parent=51 // pred_region
          %374 = dma.done [#allocation8], 512
        $region68: #{tpu_custom_call.1} parent=51 // pred_fallthru
          _
        // Predicated region
        $region69: #{tpu_custom_call.1} parent=51 // pred_check
          %p375 = pneg %p130
        $region70: #{tpu_custom_call.1} parent=51 // pred_check_branch
          %377 = sbr.rel (%p375) target = $region72
        $region71: #{tpu_custom_call.1} parent=51 // pred_region
          %379 = dma.done [#allocation8], 16
        $region72: #{tpu_custom_call.1} parent=51 // pred_fallthru
          _
        // Predicated region
        $region73: #{tpu_custom_call.1} parent=51 // pred_check
          %p380 = pneg %p172
        $region74: #{tpu_custom_call.1} parent=51 // pred_check_branch
          %382 = sbr.rel (%p380) target = $region76
        $region75: #{tpu_custom_call.1} parent=51 // pred_region
          %384 = dma.done [#allocation11], 512
        $region76: #{tpu_custom_call.1} parent=51 // pred_fallthru
          _
        // Predicated region
        $region77: #{tpu_custom_call.1} parent=51 // pred_check
          %p385 = pneg %p193
        $region78: #{tpu_custom_call.1} parent=51 // pred_check_branch
          %387 = sbr.rel (%p385) target = $region80
        $region79: #{tpu_custom_call.1} parent=51 // pred_region
          %389 = dma.done [#allocation11], 512
        $region80: #{tpu_custom_call.1} parent=51 // pred_fallthru
          _
        %s390 = sand.u32 %s33, 1
        %s391 = scalar_lea.sflag [#allocation3], %s390
        %s392 = sand.u32 %s33, 1
        %s393 = smul.addr %s392, 16
        %s394 = scalar_lea.vmem [#allocation2], %s393
        %p395 = pneg %p46
        %p396 = pneg %p43
        %p397 = pneg %p67
        %p398 = pneg %p64
        %p399 = pneg %p88
        %p400 = pneg %p85
        %p401 = pneg %p109
        %p402 = pneg %p106
        %p403 = pneg %p130
        %p404 = pneg %p127
        %p405 = pneg %p151
        %p406 = pneg %p148
        %p407 = pneg %p172
        %p408 = pneg %p169
        %p409 = pneg %p193
        %p410 = pneg %p190
        %p411 = pneg %p219
        %p412 = pneg %p216
        %p413 = scmp.lt.s32.totalorder %s25, 1
        %s414 = scalar_select %p413, %s25, 1
        %s415 = smul.addr %s414, 6
        %s416 = smul.addr %s415, 8
        %s417 = scalar_lea.vmem %s8, %s416
        %p418 = scmp.lt.s32.totalorder %s25, 1
        %s419 = scalar_select %p418, %s25, 1
        %s420 = smul.addr %s419, 6
        %s421 = smul.addr %s420, 8
        %s422 = scalar_lea.vmem %s8, %s421
        %v423 = vld [vmem:[%s354] sm:$0xff]
        %v424 = vld [vmem:[%s354 + $0x8] sm:$0xff]
        %v425 = vld [vmem:[#allocation4] sm:$0xff]
        %v426 = vld [vmem:[#allocation4 + $0x8] sm:$0xff]
        %v427 = vld [vmem:[#allocation4 + $0x10] sm:$0xff]
        %v428 = vld [vmem:[#allocation4 + $0x18] sm:$0xff]
        %v429 = vld [vmem:[#allocation6] sm:$0x1]
        %v431 = vperm.slane %v429, 0
        %vm433 = vcmask 261120
        %v435 = vsel %vm433, %v423, 0
        %v438 = vsel %vm433, %v424, 0
        %v441 = vsel %vm433, %v425, 0
        %v444 = vsel %vm433, %v426, 0
        %v447 = vsel %vm433, %v427, 0
        %v450 = vsel %vm433, %v428, 0
        %452 = vmatpush.xpose.msra.mxu0 0.0
        %453 = vmatpush.xpose.msra.mxu0 0.0
        %454 = vmatpush.xpose.msra.mxu0 0.0
        %455 = vmatpush.xpose.msra.mxu0 0.0
        %456 = vmatpush.xpose.msra.mxu0 0.0
        %457 = vmatpush.xpose.msra.mxu0 0.0
        %458 = vmatpush.xpose.msra.mxu0 0.0
        %459 = vmatpush.xpose.msra.mxu0 0.0
        %460 = vmatpush.xpose.msra.mxu0 0.0
        %461 = vmatpush.xpose.msra.mxu0 0.0
        %462 = vmatpush.xpose.msra.mxu0 0.0
        %463 = vmatpush.xpose.msra.mxu0 0.0
        %464 = vmatpush.xpose.msra.mxu0 %v450
        %465 = vmatpush.xpose.msra.mxu0 %v447
        %466 = vmatpush.xpose.msra.mxu0 %v444
        %467 = vmatpush.xpose.msra.mxu0 %v441
        %468 = vmatmul.f32.gmra.mxu0 %v435
        %v469 = vpop.f32.mrf.mxu0
        %v470 = vadd.f32 %v431, %v469
        %471 = vmatmul.f32.gmra.mxu0 %v438
        %v472 = vpop.f32.mrf.mxu0
        %v473 = vadd.f32 %v431, %v472
        %474 = vdwg.mxu0
        %v475 = vld [vmem:[#allocation7] sm:$0xff]
        %v476 = vld [vmem:[#allocation7 + $0x8] sm:$0xff]
        %v477 = vld [vmem:[#allocation7 + $0x10] sm:$0xff]
        %v478 = vld [vmem:[#allocation7 + $0x18] sm:$0xff]
        %v479 = vld [vmem:[#allocation9] sm:$0x1]
        %v481 = vperm.slane %v479, 0
        %v484 = vsel %vm433, %v475, 0
        %v487 = vsel %vm433, %v476, 0
        %v490 = vsel %vm433, %v477, 0
        %v493 = vsel %vm433, %v478, 0
        %495 = vmatpush.xpose.msra.mxu0 0.0
        %496 = vmatpush.xpose.msra.mxu0 0.0
        %497 = vmatpush.xpose.msra.mxu0 0.0
        %498 = vmatpush.xpose.msra.mxu0 0.0
        %499 = vmatpush.xpose.msra.mxu0 0.0
        %500 = vmatpush.xpose.msra.mxu0 0.0
        %501 = vmatpush.xpose.msra.mxu0 0.0
        %502 = vmatpush.xpose.msra.mxu0 0.0
        %503 = vmatpush.xpose.msra.mxu0 0.0
        %504 = vmatpush.xpose.msra.mxu0 0.0
        %505 = vmatpush.xpose.msra.mxu0 0.0
        %506 = vmatpush.xpose.msra.mxu0 0.0
        %507 = vmatpush.xpose.msra.mxu0 %v493
        %508 = vmatpush.xpose.msra.mxu0 %v490
        %509 = vmatpush.xpose.msra.mxu0 %v487
        %510 = vmatpush.xpose.msra.mxu0 %v484
        %511 = vmatmul.f32.gmra.mxu0 %v435
        %v512 = vpop.f32.mrf.mxu0
        %v513 = vadd.f32 %v481, %v512
        %514 = vmatmul.f32.gmra.mxu0 %v438
        %v515 = vpop.f32.mrf.mxu0
        %v516 = vadd.f32 %v481, %v515
        %517 = vdwg.mxu0
        %v518 = vld [vmem:[#allocation10] sm:$0xff]
        %v519 = vld [vmem:[#allocation10 + $0x8] sm:$0xff]
        %v520 = vld [vmem:[#allocation10 + $0x10] sm:$0xff]
        %v521 = vld [vmem:[#allocation10 + $0x18] sm:$0xff]
        %v523 = vsel %vm433, %v513, 0
        %v526 = vsel %vm433, %v516, 0
        %v529 = vsel %vm433, %v518, 0
        %v532 = vsel %vm433, %v519, 0
        %v535 = vsel %vm433, %v520, 0
        %v538 = vsel %vm433, %v521, 0
        %540 = vmatpush.xpose.msra.mxu0 0.0
        %541 = vmatpush.xpose.msra.mxu0 0.0
        %542 = vmatpush.xpose.msra.mxu0 0.0
        %543 = vmatpush.xpose.msra.mxu0 0.0
        %544 = vmatpush.xpose.msra.mxu0 0.0
        %545 = vmatpush.xpose.msra.mxu0 0.0
        %546 = vmatpush.xpose.msra.mxu0 0.0
        %547 = vmatpush.xpose.msra.mxu0 0.0
        %548 = vmatpush.xpose.msra.mxu0 0.0
        %549 = vmatpush.xpose.msra.mxu0 0.0
        %550 = vmatpush.xpose.msra.mxu0 0.0
        %551 = vmatpush.xpose.msra.mxu0 0.0
        %552 = vmatpush.xpose.msra.mxu0 %v538
        %553 = vmatpush.xpose.msra.mxu0 %v535
        %554 = vmatpush.xpose.msra.mxu0 %v532
        %555 = vmatpush.xpose.msra.mxu0 %v529
        %556 = vmatmul.f32.gmra.mxu0 %v523
        %v557 = vpop.f32.mrf.mxu0
        %v558 = vadd.f32 0.0, %v557
        %559 = vmatmul.f32.gmra.mxu0 %v526
        %v560 = vpop.f32.mrf.mxu0
        %v561 = vadd.f32 0.0, %v560
        %562 = vdwg.mxu0
        %v563 = vld [vmem:[#allocation12] sm:$0xff]
        %v564 = vld [vmem:[#allocation12 + $0x8] sm:$0xff]
        %v565 = vld [vmem:[#allocation12 + $0x10] sm:$0xff]
        %v566 = vld [vmem:[#allocation12 + $0x18] sm:$0xff]
        %v568 = vsel %vm433, %v563, 0
        %v571 = vsel %vm433, %v564, 0
        %v574 = vsel %vm433, %v565, 0
        %v577 = vsel %vm433, %v566, 0
        %579 = vmatpush.xpose.msra.mxu0 0.0
        %580 = vmatpush.xpose.msra.mxu0 0.0
        %581 = vmatpush.xpose.msra.mxu0 0.0
        %582 = vmatpush.xpose.msra.mxu0 0.0
        %583 = vmatpush.xpose.msra.mxu0 0.0
        %584 = vmatpush.xpose.msra.mxu0 0.0
        %585 = vmatpush.xpose.msra.mxu0 0.0
        %586 = vmatpush.xpose.msra.mxu0 0.0
        %587 = vmatpush.xpose.msra.mxu0 0.0
        %588 = vmatpush.xpose.msra.mxu0 0.0
        %589 = vmatpush.xpose.msra.mxu0 0.0
        %590 = vmatpush.xpose.msra.mxu0 0.0
        %591 = vmatpush.xpose.msra.mxu0 %v577
        %592 = vmatpush.xpose.msra.mxu0 %v574
        %593 = vmatpush.xpose.msra.mxu0 %v571
        %594 = vmatpush.xpose.msra.mxu0 %v568
        %595 = vmatmul.f32.gmra.mxu0 %v523
        %v596 = vpop.f32.mrf.mxu0
        %v597 = vadd.f32 0.0, %v596
        %598 = vmatmul.f32.gmra.mxu0 %v526
        %v599 = vpop.f32.mrf.mxu0
        %v600 = vadd.f32 0.0, %v599
        %601 = vdwg.mxu0
        %v602 = vld [vmem:[%s5] sm:$0xf]
        %vm605 = vcmask 1043456
        %v606 = vrot.slane %v470, 4
        %v607 = vrot.slane %v473, 4
        %v608 = vsel %vm605, %v606, %v607
        %v610 = vsel %vm605, %v602, %v606
        %v612 = vsel %vm433, %v610, 0
        %v614 = vsel %vm433, %v608, 0
        %v616 = vsel %vm433, %v607, 0
        %v619 = vsel %vm433, %v558, 0
        %v622 = vsel %vm433, %v561, 0
        %624 = vmatpush.xpose.msra.mxu0 0.0
        %625 = vmatpush.xpose.msra.mxu0 0.0
        %626 = vmatpush.xpose.msra.mxu0 0.0
        %627 = vmatpush.xpose.msra.mxu0 0.0
        %628 = vmatpush.xpose.msra.mxu0 0.0
        %629 = vmatpush.xpose.msra.mxu0 0.0
        %630 = vmatpush.xpose.msra.mxu0 0.0
        %631 = vmatpush.xpose.msra.mxu0 0.0
        %632 = vmatpush.xpose.msra.mxu0 0.0
        %633 = vmatpush.xpose.msra.mxu0 0.0
        %634 = vmatpush.xpose.msra.mxu0 0.0
        %635 = vmatpush.xpose.msra.mxu0 0.0
        %636 = vmatpush.xpose.msra.mxu0 0.0
        %637 = vmatpush.xpose.msra.mxu0 0.0
        %638 = vmatpush.xpose.msra.mxu0 %v622
        %639 = vmatpush.xpose.msra.mxu0 %v619
        %640 = vmatmul.f32.gmra.mxu0 %v612
        %v641 = vpop.f32.mrf.mxu0
        %v642 = vadd.f32 0.0, %v641
        %643 = vmatmul.f32.gmra.mxu0 %v614
        %v644 = vpop.f32.mrf.mxu0
        %v645 = vadd.f32 0.0, %v644
        %646 = vmatmul.f32.gmra.mxu0 %v616
        %v647 = vpop.f32.mrf.mxu0
        %v648 = vadd.f32 0.0, %v647
        %649 = vdwg.mxu0
        %vm650 = vcmask 130048
        %651 = vst.msk [vmem:[%s422] sm:$0xff] %vm650, %v642
        %652 = vst.msk [vmem:[%s422 + $0x8] sm:$0xff] %vm650, %v645
        %vm653 = vcmask 125952
        %654 = vst.msk [vmem:[%s422 + $0x10] sm:$0xf] %vm653, %v648
        %v656 = vsel %vm433, %v597, 0
        %v659 = vsel %vm433, %v600, 0
        %661 = vmatpush.xpose.msra.mxu0 0.0
        %662 = vmatpush.xpose.msra.mxu0 0.0
        %663 = vmatpush.xpose.msra.mxu0 0.0
        %664 = vmatpush.xpose.msra.mxu0 0.0
        %665 = vmatpush.xpose.msra.mxu0 0.0
        %666 = vmatpush.xpose.msra.mxu0 0.0
        %667 = vmatpush.xpose.msra.mxu0 0.0
        %668 = vmatpush.xpose.msra.mxu0 0.0
        %669 = vmatpush.xpose.msra.mxu0 0.0
        %670 = vmatpush.xpose.msra.mxu0 0.0
        %671 = vmatpush.xpose.msra.mxu0 0.0
        %672 = vmatpush.xpose.msra.mxu0 0.0
        %673 = vmatpush.xpose.msra.mxu0 0.0
        %674 = vmatpush.xpose.msra.mxu0 0.0
        %675 = vmatpush.xpose.msra.mxu0 %v659
        %676 = vmatpush.xpose.msra.mxu0 %v656
        %677 = vmatmul.f32.gmra.mxu0 %v612
        %v678 = vpop.f32.mrf.mxu0
        %v679 = vadd.f32 0.0, %v678
        %680 = vmatmul.f32.gmra.mxu0 %v614
        %v681 = vpop.f32.mrf.mxu0
        %v682 = vadd.f32 0.0, %v681
        %683 = vmatmul.f32.gmra.mxu0 %v616
        %v684 = vpop.f32.mrf.mxu0
        %v685 = vadd.f32 0.0, %v684
        %686 = vdwg.mxu0
        %s687 = scalar_lea.vmem %s422, 24
        %688 = vst.msk [vmem:[%s687] sm:$0xff] %vm650, %v679
        %689 = vst.msk [vmem:[%s687 + $0x8] sm:$0xff] %vm650, %v682
        %690 = vst.msk [vmem:[%s687 + $0x10] sm:$0xf] %vm653, %v685
        %p691 = scmp.lt.s32.totalorder %s25, 1
        %s692 = scalar_select %p691, %s25, 1
        %s693 = smul.addr %s692, 6
        %s694 = smul.addr %s693, 8
        %s695 = scalar_lea.vmem %s8, %s694
        // Predicated region
        $region81: #{tpu_custom_call.1} parent=51 // pred_check
          %p696 = pneg %p216
        $region82: #{tpu_custom_call.1} parent=51 // pred_check_branch
          %698 = sbr.rel (%p696) target = $region84
        $region83: #{tpu_custom_call.1} parent=51 // pred_region
          _
        $region84: #{tpu_custom_call.1} parent=51 // pred_fallthru
          _
      $region52: #{tpu_custom_call.1} parent=5 // pred_fallthru
        _
      %p699 = scmp.le.s32.totalorder 2, %s20
      // Predicated region
      $region85: #{tpu_custom_call.1} parent=5 // pred_check
        %p700 = pneg %p699
      $region86: #{tpu_custom_call.1} parent=5 // pred_check_branch
        %702 = sbr.rel (%p700) target = $region88
      $region87: #{tpu_custom_call.1} parent=5 // pred_region
        %s703 = ssub.s32 %s20, 2
        // Predicated region
        $region89: #{tpu_custom_call.1} parent=87 // pred_check
          %p704 = pneg %p222
        $region90: #{tpu_custom_call.1} parent=87 // pred_check_branch
          %706 = sbr.rel (%p704) target = $region92
        $region91: #{tpu_custom_call.1} parent=87 // pred_region
          %p707 = scmp.lt.s32.totalorder %s26, 1
          %s708 = scalar_select %p707, %s26, 1
          %s709 = smul.addr %s708, 6
          %s710 = smul.addr %s709, 8
          %s711 = scalar_lea.vmem %s8, %s710
        $region92: #{tpu_custom_call.1} parent=87 // pred_fallthru
          _
      $region88: #{tpu_custom_call.1} parent=5 // pred_fallthru
        _
    $region6: #{tpu_custom_call.1} parent=1 // loop_footer
      %s24 = sadd.s32 1, %s20
    $region7: #{tpu_custom_call.1} parent=1 // loop_footer_branch
      %19 = sbr.rel target = $region3
    $region8: #{tpu_custom_call.1} parent=1 // loop_exit
      _
    %712 = vsyncpa [#allocation3], 1
    %s713 = scalar_lea.sflag [#allocation3], 1
    %714 = vsyncpa %s713, 1
    %715 = vsyncpa [#allocation5], 1
    %716 = vsyncpa [#allocation8], 1
    %717 = vsyncpa [#allocation11], 1

</llo_original>
